<compile_context>
chip_gen: v5e
topology: v5e:2x2
jax: 0.10.0
libtpu: 0.0.40
codegen_flags: <defaults>
</compile_context>

<pallas_src>
import math
import functools

import jax
import jax.numpy as jnp
from jax.experimental import pallas as pl
from jax.experimental.pallas import tpu as pltpu


# ----------------------------------------------------------------------------
# Stage 1: fused QKV projection kernel
# ----------------------------------------------------------------------------
def _qkv_proj_kernel(x_ref, w_ref, b_ref, q_ref, k_ref, v_ref, *, e, scale):
    # x_ref: (TM, D_in)   w_ref: (D_in, 3E)   b_ref: (1, 3E)
    # q/k/v_ref: (TM, E)
    y = jnp.dot(x_ref[...], w_ref[...],
                preferred_element_type=jnp.float32) + b_ref[...]
    # Fold the 1/sqrt(E) attention scale into q here (E columns) instead of
    # scaling the (Tq, Tk) score tiles later.
    q_ref[...] = (y[:, :e] * scale).astype(q_ref.dtype)
    k_ref[...] = y[:, e:2 * e].astype(k_ref.dtype)
    v_ref[...] = y[:, 2 * e:].astype(v_ref.dtype)


# ----------------------------------------------------------------------------
# Stage 2: flash-attention kernel (online softmax over kv tiles)
# ----------------------------------------------------------------------------
def _flash_attn_kernel(q_ref, k_ref, v_ref, o_ref, m_sc, l_sc, acc_sc):
    # q_ref: (1, Tq, E)  k_ref/v_ref: (1, Tk, E)  o_ref: (1, Tq, E)
    # m_sc/l_sc: (Tq, 1) f32    acc_sc: (Tq, E) f32
    ki = pl.program_id(2)

    @pl.when(ki == 0)
    def _():
        m_sc[...] = jnp.full_like(m_sc, -jnp.inf)
        l_sc[...] = jnp.zeros_like(l_sc)
        acc_sc[...] = jnp.zeros_like(acc_sc)

    q = q_ref[0]                       # (Tq, E), already scaled by 1/sqrt(E)
    k = k_ref[0]                       # (Tk, E)

    # Contract on the last dims directly — no materialized K transpose.
    s = jax.lax.dot_general(q, k,
                            dimension_numbers=(((1,), (1,)), ((), ())),
                            preferred_element_type=jnp.float32)   # (Tq, Tk)

    m_prev = m_sc[...]
    m_new = jnp.maximum(m_prev, jnp.max(s, axis=-1, keepdims=True))
    alpha = jnp.exp(m_prev - m_new)
    p = jnp.exp(s - m_new)

    l_sc[...] = alpha * l_sc[...] + jnp.sum(p, axis=-1, keepdims=True)
    acc_sc[...] = alpha * acc_sc[...] + jnp.dot(
        p.astype(v_ref.dtype), v_ref[0], preferred_element_type=jnp.float32)
    m_sc[...] = m_new

    @pl.when(ki == pl.num_programs(2) - 1)
    def _():
        inv_l = pl.reciprocal(l_sc[...], approx=True)   # EUP vrcp — free slot
        o_ref[0] = (acc_sc[...] * inv_l).astype(o_ref.dtype)


# ----------------------------------------------------------------------------
# Wrapper
# ----------------------------------------------------------------------------
def _pick_tile(n, candidates):
    for t in candidates:
        if n >= t and n % t == 0:
            return t
    return n   # small / non-divisible sizes: use the full extent


_VMEM_LIMIT = 64 * 1024 * 1024   # safe on v5e/v6e (128 MiB) and v7x (64 MiB)


@jax.jit
def self_attention(x, wq, wk, wv, bq, bk, bv):
    B, S, D_in = x.shape
    E = wq.shape[1]
    scale = 1.0 / math.sqrt(E)

    # ---------------- fused QKV projection: (B*S, D_in) @ (D_in, 3E) --------
    M = B * S
    x2 = x.reshape(M, D_in)
    w_qkv = jnp.concatenate([wq, wk, wv], axis=1)     # (D_in, 3E)
    b_qkv = jnp.concatenate([bq, bk, bv], axis=1)     # (1, 3E)

    TM = _pick_tile(M, (512, 256, 128))
    row_spec = pl.BlockSpec((TM, E), lambda i: (i, 0))

    q2, k2, v2 = pl.pallas_call(
        functools.partial(_qkv_proj_kernel, e=E, scale=scale),
        out_shape=(jax.ShapeDtypeStruct((M, E), x.dtype),) * 3,
        grid_spec=pltpu.PrefetchScalarGridSpec(
            num_scalar_prefetch=0,
            grid=(M // TM,),
            in_specs=[pl.BlockSpec((TM, D_in), lambda i: (i, 0)),
                      pl.BlockSpec((D_in, 3 * E), lambda i: (0, 0)),
                      pl.BlockSpec((1, 3 * E), lambda i: (0, 0))],
            out_specs=[row_spec, row_spec, row_spec],
        ),
        compiler_params=pltpu.CompilerParams(
            dimension_semantics=("parallel",),
            vmem_limit_bytes=_VMEM_LIMIT),
    )(x2, w_qkv, b_qkv)

    q = q2.reshape(B, S, E)
    k = k2.reshape(B, S, E)
    v = v2.reshape(B, S, E)

    # ---------------- flash attention over (B, q_tile, kv_tile) -------------
    Tq = _pick_tile(S, (256, 128))
    Tk = _pick_tile(S, (512, 256, 128))

    q_spec = pl.BlockSpec((1, Tq, E), lambda b, qi, ki: (b, qi, 0))
    kv_spec = pl.BlockSpec((1, Tk, E), lambda b, qi, ki: (b, ki, 0))
    o_spec = pl.BlockSpec((1, Tq, E), lambda b, qi, ki: (b, qi, 0))

    out = pl.pallas_call(
        _flash_attn_kernel,
        out_shape=jax.ShapeDtypeStruct((B, S, E), x.dtype),
        grid_spec=pltpu.PrefetchScalarGridSpec(
            num_scalar_prefetch=0,
            grid=(B, S // Tq, S // Tk),
            in_specs=[q_spec, kv_spec, kv_spec],
            out_specs=o_spec,
            scratch_shapes=[pltpu.VMEM((Tq, 1), jnp.float32),
                            pltpu.VMEM((Tq, 1), jnp.float32),
                            pltpu.VMEM((Tq, E), jnp.float32)],
        ),
        compiler_params=pltpu.CompilerParams(
            dimension_semantics=("parallel", "parallel", "arbitrary"),
            vmem_limit_bytes=_VMEM_LIMIT),
    )(q, k, v)
    return out


# ----------------------------------------------------------------------------
# Pure-JAX reference and self-test
# ----------------------------------------------------------------------------
def _reference(x, wq, wk, wv, bq, bk, bv):
    q = x @ wq + bq
    k = x @ wk + bk
    v = x @ wv + bv
    scores = jnp.einsum("bsd,btd->bst", q, k) / math.sqrt(k.shape[-1])
    attn = jax.nn.softmax(scores, axis=-1)
    return jnp.einsum("bst,btd->bsd", attn, v)


if __name__ == "__main__":
    key = jax.random.PRNGKey(0)
    B, S, D_in, E = 2, 8, 32, 32

    k0, k1, k2, k3, k4, k5, k6 = jax.random.split(key, 7)
    x = jax.random.normal(k0, (B, S, D_in), dtype=jnp.float32)

    # Deterministic init mimicking torch Linear's uniform(-1/sqrt(fan_in), ...)
    bound = 1.0 / math.sqrt(D_in)
    wq = jax.random.uniform(k1, (D_in, E), minval=-bound, maxval=bound, dtype=jnp.float32)
    wk = jax.random.uniform(k2, (D_in, E), minval=-bound, maxval=bound, dtype=jnp.float32)
    wv = jax.random.uniform(k3, (D_in, E), minval=-bound, maxval=bound, dtype=jnp.float32)
    bq = jax.random.uniform(k4, (1, E), minval=-bound, maxval=bound, dtype=jnp.float32)
    bk = jax.random.uniform(k5, (1, E), minval=-bound, maxval=bound, dtype=jnp.float32)
    bv = jax.random.uniform(k6, (1, E), minval=-bound, maxval=bound, dtype=jnp.float32)

    out = self_attention(x, wq, wk, wv, bq, bk, bv)
    out = jax.block_until_ready(out)

    ref = _reference(x, wq, wk, wv, bq, bk, bv)
    assert out.shape == (B, S, E)
    # Tolerance loosened slightly because the softmax denominator uses the
    # approximate EUP reciprocal (pl.reciprocal(approx=True)).
    assert jnp.allclose(out, ref, atol=1e-2, rtol=1e-2), "mismatch vs reference"

    print("KERNEL_OK")
</pallas_src>

<mosaic_0001>
module attributes {stable_mosaic.version = 11 : i64} {
  func.func @_qkv_proj_kernel(%arg0: i32, %arg1: memref<16x32xf32, #tpu.memory_space<vmem>>, %arg2: memref<32x96xf32, #tpu.memory_space<vmem>>, %arg3: memref<1x96xf32, #tpu.memory_space<vmem>>, %arg4: memref<16x32xf32, #tpu.memory_space<vmem>>, %arg5: memref<16x32xf32, #tpu.memory_space<vmem>>, %arg6: memref<16x32xf32, #tpu.memory_space<vmem>>) attributes {dimension_semantics = [#tpu.dimension_semantics<parallel>], iteration_bounds = array<i64: 1>, scalar_prefetch = 0 : i64, scratch_operands = 0 : i64, tpu.core_type = #tpu.core_type<tc>, window_params = [{transform_indices = @transform_0, window_bounds = array<i64: 16, 32>}, {pipeline_mode = #tpu.pipeline_mode<synchronous>, transform_indices = @transform_1, window_bounds = array<i64: 32, 96>}, {pipeline_mode = #tpu.pipeline_mode<synchronous>, transform_indices = @transform_2, window_bounds = array<i64: 1, 96>}, {transform_indices = @transform_3, window_bounds = array<i64: 16, 32>}, {transform_indices = @transform_4, window_bounds = array<i64: 16, 32>}, {transform_indices = @transform_5, window_bounds = array<i64: 16, 32>}]} {
    %c0 = arith.constant 0 : index
    %c0_0 = arith.constant 0 : index
    %0 = vector.load %arg1[%c0, %c0_0] : memref<16x32xf32, #tpu.memory_space<vmem>>, vector<16x32xf32>
    %c0_1 = arith.constant 0 : index
    %c0_2 = arith.constant 0 : index
    %1 = vector.load %arg2[%c0_1, %c0_2] : memref<32x96xf32, #tpu.memory_space<vmem>>, vector<32x96xf32>
    %cst = arith.constant dense<0.000000e+00> : vector<16x96xf32>
    %2 = tpu.matmul %0, %1, %cst {dimension_numbers = #tpu.dot_dimension_numbers<[1], [0], [0], [1], [0, 0, 1, 1], [], []>} : vector<16x32xf32>, vector<32x96xf32>, vector<16x96xf32> -> vector<16x96xf32>
    %c0_3 = arith.constant 0 : index
    %c0_4 = arith.constant 0 : index
    %3 = vector.load %arg3[%c0_3, %c0_4] : memref<1x96xf32, #tpu.memory_space<vmem>>, vector<1x96xf32>
    %4 = vector.broadcast %3 : vector<1x96xf32> to vector<16x96xf32>
    %5 = arith.addf %2, %4 : vector<16x96xf32>
    %6 = vector.extract_strided_slice %5 {offsets = [0, 0], sizes = [16, 32], strides = [1, 1]} : vector<16x96xf32> to vector<16x32xf32>
    %cst_5 = arith.constant 0.176776692 : f32
    %7 = vector.broadcast %cst_5 : f32 to vector<16x32xf32>
    %8 = arith.mulf %6, %7 : vector<16x32xf32>
    %c0_6 = arith.constant 0 : index
    %c0_7 = arith.constant 0 : index
    %9 = vector.load %arg4[%c0_6, %c0_7] : memref<16x32xf32, #tpu.memory_space<vmem>>, vector<16x32xf32>
    tpu.vector_store %arg4[%c0_6, %c0_7], %8 {strides = array<i32>} : memref<16x32xf32, #tpu.memory_space<vmem>>, vector<16x32xf32>,
    %10 = vector.extract_strided_slice %5 {offsets = [0, 32], sizes = [16, 32], strides = [1, 1]} : vector<16x96xf32> to vector<16x32xf32>
    %c0_8 = arith.constant 0 : index
    %c0_9 = arith.constant 0 : index
    %11 = vector.load %arg5[%c0_8, %c0_9] : memref<16x32xf32, #tpu.memory_space<vmem>>, vector<16x32xf32>
    tpu.vector_store %arg5[%c0_8, %c0_9], %10 {strides = array<i32>} : memref<16x32xf32, #tpu.memory_space<vmem>>, vector<16x32xf32>,
    %12 = vector.extract_strided_slice %5 {offsets = [0, 64], sizes = [16, 32], strides = [1, 1]} : vector<16x96xf32> to vector<16x32xf32>
    %c0_10 = arith.constant 0 : index
    %c0_11 = arith.constant 0 : index
    %13 = vector.load %arg6[%c0_10, %c0_11] : memref<16x32xf32, #tpu.memory_space<vmem>>, vector<16x32xf32>
    tpu.vector_store %arg6[%c0_10, %c0_11], %12 {strides = array<i32>} : memref<16x32xf32, #tpu.memory_space<vmem>>, vector<16x32xf32>,
    return
  }
  func.func @transform_0(%arg0: i32) -> (i32, i32) {
    %c0_i32 = arith.constant 0 : i32
    %c0_i32_0 = arith.constant 0 : i32
    return %arg0, %c0_i32 : i32, i32
  }
  func.func @transform_1(%arg0: i32) -> (i32, i32) {
    %c0_i32 = arith.constant 0 : i32
    %c0_i32_0 = arith.constant 0 : i32
    %c0_i32_1 = arith.constant 0 : i32
    return %c0_i32, %c0_i32_0 : i32, i32
  }
  func.func @transform_2(%arg0: i32) -> (i32, i32) {
    %c0_i32 = arith.constant 0 : i32
    %c0_i32_0 = arith.constant 0 : i32
    %c0_i32_1 = arith.constant 0 : i32
    return %c0_i32, %c0_i32_0 : i32, i32
  }
  func.func @transform_3(%arg0: i32) -> (i32, i32) {
    %c0_i32 = arith.constant 0 : i32
    %c0_i32_0 = arith.constant 0 : i32
    return %arg0, %c0_i32 : i32, i32
  }
  func.func @transform_4(%arg0: i32) -> (i32, i32) {
    %c0_i32 = arith.constant 0 : i32
    %c0_i32_0 = arith.constant 0 : i32
    return %arg0, %c0_i32 : i32, i32
  }
  func.func @transform_5(%arg0: i32) -> (i32, i32) {
    %c0_i32 = arith.constant 0 : i32
    %c0_i32_0 = arith.constant 0 : i32
    return %arg0, %c0_i32 : i32, i32
  }
}

module attributes {stable_mosaic.version = 11 : i64} {
  func.func @_flash_attn_kernel(%arg0: i32, %arg1: i32, %arg2: i32, %arg3: memref<1x8x32xf32, #tpu.memory_space<vmem>>, %arg4: memref<1x8x32xf32, #tpu.memory_space<vmem>>, %arg5: memref<1x8x32xf32, #tpu.memory_space<vmem>>, %arg6: memref<1x8x32xf32, #tpu.memory_space<vmem>>, %arg7: memref<8x1xf32, #tpu.memory_space<vmem>>, %arg8: memref<8x1xf32, #tpu.memory_space<vmem>>, %arg9: memref<8x32xf32, #tpu.memory_space<vmem>>) attributes {dimension_semantics = [#tpu.dimension_semantics<parallel>, #tpu.dimension_semantics<parallel>, #tpu.dimension_semantics<arbitrary>], iteration_bounds = array<i64: 2, 1, 1>, scalar_prefetch = 0 : i64, scratch_operands = 3 : i64, tpu.core_type = #tpu.core_type<tc>, window_params = [{transform_indices = @transform_0, window_bounds = array<i64: 1, 8, 32>}, {transform_indices = @transform_1, window_bounds = array<i64: 1, 8, 32>}, {transform_indices = @transform_2, window_bounds = array<i64: 1, 8, 32>}, {transform_indices = @transform_3, window_bounds = array<i64: 1, 8, 32>}]} {
    %c0_i32 = arith.constant 0 : i32
    %0 = arith.cmpi eq, %arg2, %c0_i32 : i32
    %1 = arith.extui %0 : i1 to i32
    %c0_i32_0 = arith.constant 0 : i32
    %2 = arith.cmpi ne, %1, %c0_i32_0 : i32
    scf.if %2 {
      %cst_26 = arith.constant 0xFF800000 : f32
      %35 = vector.broadcast %cst_26 : f32 to vector<8x1xf32>
      %c0_27 = arith.constant 0 : index
      %c0_28 = arith.constant 0 : index
      %36 = vector.load %arg7[%c0_27, %c0_28] : memref<8x1xf32, #tpu.memory_space<vmem>>, vector<8x1xf32>
      tpu.vector_store %arg7[%c0_27, %c0_28], %35 {strides = array<i32>} : memref<8x1xf32, #tpu.memory_space<vmem>>, vector<8x1xf32>,
      %cst_29 = arith.constant 0.000000e+00 : f32
      %37 = vector.broadcast %cst_29 : f32 to vector<8x1xf32>
      %c0_30 = arith.constant 0 : index
      %c0_31 = arith.constant 0 : index
      %38 = vector.load %arg8[%c0_30, %c0_31] : memref<8x1xf32, #tpu.memory_space<vmem>>, vector<8x1xf32>
      tpu.vector_store %arg8[%c0_30, %c0_31], %37 {strides = array<i32>} : memref<8x1xf32, #tpu.memory_space<vmem>>, vector<8x1xf32>,
      %cst_32 = arith.constant 0.000000e+00 : f32
      %39 = vector.broadcast %cst_32 : f32 to vector<8x32xf32>
      %c0_33 = arith.constant 0 : index
      %c0_34 = arith.constant 0 : index
      %40 = vector.load %arg9[%c0_33, %c0_34] : memref<8x32xf32, #tpu.memory_space<vmem>>, vector<8x32xf32>
      tpu.vector_store %arg9[%c0_33, %c0_34], %39 {strides = array<i32>} : memref<8x32xf32, #tpu.memory_space<vmem>>, vector<8x32xf32>,
    } else {
    }
    %c0 = arith.constant 0 : index
    %c0_1 = arith.constant 0 : index
    %c0_2 = arith.constant 0 : index
    %3 = vector.load %arg3[%c0, %c0_1, %c0_2] : memref<1x8x32xf32, #tpu.memory_space<vmem>>, vector<1x8x32xf32>
    %4 = vector.shape_cast %3 : vector<1x8x32xf32> to vector<8x32xf32>
    %c0_3 = arith.constant 0 : index
    %c0_4 = arith.constant 0 : index
    %c0_5 = arith.constant 0 : index
    %5 = vector.load %arg4[%c0_3, %c0_4, %c0_5] : memref<1x8x32xf32, #tpu.memory_space<vmem>>, vector<1x8x32xf32>
    %6 = vector.shape_cast %5 : vector<1x8x32xf32> to vector<8x32xf32>
    %cst = arith.constant dense<0.000000e+00> : vector<8x8xf32>
    %7 = tpu.matmul %4, %6, %cst {dimension_numbers = #tpu.dot_dimension_numbers<[1], [1], [0], [0], [0, 0, 1, 0], [], []>} : vector<8x32xf32>, vector<8x32xf32>, vector<8x8xf32> -> vector<8x8xf32>
    %c0_6 = arith.constant 0 : index
    %c0_7 = arith.constant 0 : index
    %8 = vector.load %arg7[%c0_6, %c0_7] : memref<8x1xf32, #tpu.memory_space<vmem>>, vector<8x1xf32>
    %cst_8 = arith.constant dense<0xFF800000> : vector<8xf32>
    %9 = vector.multi_reduction <maximumf>, %7, %cst_8 [1] : vector<8x8xf32> to vector<8xf32>
    %10 = vector.shape_cast %9 : vector<8xf32> to vector<8x1xf32>
    %11 = arith.maximumf %8, %10 : vector<8x1xf32>
    %12 = arith.subf %8, %11 : vector<8x1xf32>
    %13 = math.exp %12 : vector<8x1xf32>
    %14 = vector.broadcast %11 : vector<8x1xf32> to vector<8x8xf32>
    %15 = arith.subf %7, %14 : vector<8x8xf32>
    %16 = math.exp %15 : vector<8x8xf32>
    %c0_9 = arith.constant 0 : index
    %c0_10 = arith.constant 0 : index
    %17 = vector.load %arg8[%c0_9, %c0_10] : memref<8x1xf32, #tpu.memory_space<vmem>>, vector<8x1xf32>
    %18 = arith.mulf %13, %17 : vector<8x1xf32>
    %cst_11 = arith.constant dense<0.000000e+00> : vector<8xf32>
    %19 = vector.multi_reduction <add>, %16, %cst_11 [1] : vector<8x8xf32> to vector<8xf32>
    %20 = vector.shape_cast %19 : vector<8xf32> to vector<8x1xf32>
    %21 = arith.addf %18, %20 : vector<8x1xf32>
    %c0_12 = arith.constant 0 : index
    %c0_13 = arith.constant 0 : index
    %22 = vector.load %arg8[%c0_12, %c0_13] : memref<8x1xf32, #tpu.memory_space<vmem>>, vector<8x1xf32>
    tpu.vector_store %arg8[%c0_12, %c0_13], %21 {strides = array<i32>} : memref<8x1xf32, #tpu.memory_space<vmem>>, vector<8x1xf32>,
    %c0_14 = arith.constant 0 : index
    %c0_15 = arith.constant 0 : index
    %23 = vector.load %arg9[%c0_14, %c0_15] : memref<8x32xf32, #tpu.memory_space<vmem>>, vector<8x32xf32>
    %24 = vector.broadcast %13 : vector<8x1xf32> to vector<8x32xf32>
    %25 = arith.mulf %24, %23 : vector<8x32xf32>
    %c0_16 = arith.constant 0 : index
    %c0_17 = arith.constant 0 : index
    %c0_18 = arith.constant 0 : index
    %26 = vector.load %arg5[%c0_16, %c0_17, %c0_18] : memref<1x8x32xf32, #tpu.memory_space<vmem>>, vector<1x8x32xf32>
    %27 = vector.shape_cast %26 : vector<1x8x32xf32> to vector<8x32xf32>
    %cst_19 = arith.constant dense<0.000000e+00> : vector<8x32xf32>
    %28 = tpu.matmul %16, %27, %cst_19 {dimension_numbers = #tpu.dot_dimension_numbers<[1], [0], [0], [1], [0, 0, 1, 1], [], []>} : vector<8x8xf32>, vector<8x32xf32>, vector<8x32xf32> -> vector<8x32xf32>
    %29 = arith.addf %25, %28 : vector<8x32xf32>
    %c0_20 = arith.constant 0 : index
    %c0_21 = arith.constant 0 : index
    %30 = vector.load %arg9[%c0_20, %c0_21] : memref<8x32xf32, #tpu.memory_space<vmem>>, vector<8x32xf32>
    tpu.vector_store %arg9[%c0_20, %c0_21], %29 {strides = array<i32>} : memref<8x32xf32, #tpu.memory_space<vmem>>, vector<8x32xf32>,
    %c0_22 = arith.constant 0 : index
    %c0_23 = arith.constant 0 : index
    %31 = vector.load %arg7[%c0_22, %c0_23] : memref<8x1xf32, #tpu.memory_space<vmem>>, vector<8x1xf32>
    tpu.vector_store %arg7[%c0_22, %c0_23], %11 {strides = array<i32>} : memref<8x1xf32, #tpu.memory_space<vmem>>, vector<8x1xf32>,
    %c0_i32_24 = arith.constant 0 : i32
    %32 = arith.cmpi eq, %arg2, %c0_i32_24 : i32
    %33 = arith.extui %32 : i1 to i32
    %c0_i32_25 = arith.constant 0 : i32
    %34 = arith.cmpi ne, %33, %c0_i32_25 : i32
    scf.if %34 {
      %c0_26 = arith.constant 0 : index
      %c0_27 = arith.constant 0 : index
      %35 = vector.load %arg8[%c0_26, %c0_27] : memref<8x1xf32, #tpu.memory_space<vmem>>, vector<8x1xf32>
      %36 = tpu.reciprocal %35 {approx = true} : vector<8x1xf32> -> vector<8x1xf32>
      %c0_28 = arith.constant 0 : index
      %c0_29 = arith.constant 0 : index
      %37 = vector.load %arg9[%c0_28, %c0_29] : memref<8x32xf32, #tpu.memory_space<vmem>>, vector<8x32xf32>
      %38 = vector.broadcast %36 : vector<8x1xf32> to vector<8x32xf32>
      %39 = arith.mulf %37, %38 : vector<8x32xf32>
      %c0_30 = arith.constant 0 : index
      %c0_31 = arith.constant 0 : index
      %c0_32 = arith.constant 0 : index
      %40 = vector.load %arg6[%c0_30, %c0_31, %c0_32] : memref<1x8x32xf32, #tpu.memory_space<vmem>>, vector<1x8x32xf32>
      %41 = vector.shape_cast %40 : vector<1x8x32xf32> to vector<8x32xf32>
      %42 = vector.shape_cast %39 : vector<8x32xf32> to vector<1x8x32xf32>
      tpu.vector_store %arg6[%c0_30, %c0_31, %c0_32], %42 {strides = array<i32>} : memref<1x8x32xf32, #tpu.memory_space<vmem>>, vector<1x8x32xf32>,
    } else {
    }
    return
  }
  func.func @transform_0(%arg0: i32, %arg1: i32, %arg2: i32) -> (i32, i32, i32) {
    %c0_i32 = arith.constant 0 : i32
    %c0_i32_0 = arith.constant 0 : i32
    return %arg0, %arg1, %c0_i32 : i32, i32, i32
  }
  func.func @transform_1(%arg0: i32, %arg1: i32, %arg2: i32) -> (i32, i32, i32) {
    %c0_i32 = arith.constant 0 : i32
    %c0_i32_0 = arith.constant 0 : i32
    return %arg0, %arg2, %c0_i32 : i32, i32, i32
  }
  func.func @transform_2(%arg0: i32, %arg1: i32, %arg2: i32) -> (i32, i32, i32) {
    %c0_i32 = arith.constant 0 : i32
    %c0_i32_0 = arith.constant 0 : i32
    return %arg0, %arg2, %c0_i32 : i32, i32, i32
  }
  func.func @transform_3(%arg0: i32, %arg1: i32, %arg2: i32) -> (i32, i32, i32) {
    %c0_i32 = arith.constant 0 : i32
    %c0_i32_0 = arith.constant 0 : i32
    return %arg0, %arg1, %c0_i32 : i32, i32, i32
  }
}

</mosaic_0001>

<llo_original>
// kernel: self_attention.2
$region0: #{self_attention.2}
  #allocation0 [shape = 'u32[]', space=smem, size = 0x4, offset = 0x4, fixed_abs, tag = 'smem constant byte address 0x4 - core index']
  #allocation1 [shape = 'u32[72,128]{1,0:T(1,128)}', space=vmem, size = 0x9000, scoped, tag = 'internal scratch']
  %s0 = inlined_call_operand.vmem [shape: f32[16,32], index: 0, kind: input, shape index: {}]
  %s1 = inlined_call_operand.vmem [shape: f32[32,96], index: 1, kind: input, shape index: {}]
  %s2 = inlined_call_operand.vmem [shape: f32[1,96], index: 2, kind: input, shape index: {}]
  %s3 = inlined_call_operand.vmem [shape: f32[16,32], index: 3, kind: output, shape index: {0}]
  %s4 = inlined_call_operand.vmem [shape: f32[16,32], index: 4, kind: output, shape index: {1}]
  %s5 = inlined_call_operand.vmem [shape: f32[16,32], index: 5, kind: output, shape index: {2}]
  %6 = xla_tuple %s3, %s4, %s5
  %s7 = sld [smem:[#allocation0]]
  $region38: #{self_attention.2} parent=0
    _
  %s9 = ssub.s32 1, %s7
  %s10 = scalar_select 0, %s9, %s7
  // Predicated region
  $region2: #{self_attention.2} parent=0 // pred_check
    _
  $region3: #{self_attention.2} parent=0 // pred_check_branch
    %12 = sbr.rel (0) target = $region5
  $region4: #{self_attention.2} parent=0 // pred_region
    _
  $region5: #{self_attention.2} parent=0 // pred_fallthru
    _
  // Predicated region
  $region6: #{self_attention.2} parent=0 // pred_check
    _
  $region7: #{self_attention.2} parent=0 // pred_check_branch
    %14 = sbr.rel (0) target = $region9
  $region8: #{self_attention.2} parent=0 // pred_region
    _
  $region9: #{self_attention.2} parent=0 // pred_fallthru
    _
  // Predicated region
  $region10: #{self_attention.2} parent=0 // pred_check
    _
  $region11: #{self_attention.2} parent=0 // pred_check_branch
    %16 = sbr.rel (0) target = $region13
  $region12: #{self_attention.2} parent=0 // pred_region
    _
  $region13: #{self_attention.2} parent=0 // pred_fallthru
    _
  %v17 = vld [vmem:[%s0] sm:$0xff]
  %v18 = vld [vmem:[%s0 + $0x8] sm:$0xff]
  %v19 = vld [vmem:[%s1] sm:$0xff]
  %v20 = vld [vmem:[%s1 + $0x8] sm:$0xff]
  %v21 = vld [vmem:[%s1 + $0x10] sm:$0xff]
  %v22 = vld [vmem:[%s1 + $0x18] sm:$0xff]
  %v23 = vld [vmem:[%s2] sm:$0x1]
  %v25 = vperm.slane %v23, 0
  %vm27 = vcmask 261120
  %v29 = vsel %vm27, %v17, 0
  %v32 = vsel %vm27, %v18, 0
  %34 = vmatpush.msra.mxu0 0.0
  %35 = vmatpush.msra.mxu0 0.0
  %36 = vmatpush.msra.mxu0 0.0
  %37 = vmatpush.msra.mxu0 0.0
  %38 = vmatpush.msra.mxu0 0.0
  %39 = vmatpush.msra.mxu0 0.0
  %40 = vmatpush.msra.mxu0 0.0
  %41 = vmatpush.msra.mxu0 0.0
  %42 = vmatpush.msra.mxu0 0.0
  %43 = vmatpush.msra.mxu0 0.0
  %44 = vmatpush.msra.mxu0 0.0
  %45 = vmatpush.msra.mxu0 0.0
  %46 = vmatpush.msra.mxu0 %v22
  %47 = vmatpush.msra.mxu0 %v21
  %48 = vmatpush.msra.mxu0 %v20
  %49 = vmatpush.msra.mxu0 %v19
  %50 = vmatmul.f32.gmra.mxu0 %v29
  %v51 = vpop.f32.mrf.mxu0
  %v52 = vadd.f32 %v25, %v51
  %53 = vmatmul.f32.gmra.mxu0 %v32
  %v54 = vpop.f32.mrf.mxu0
  %v55 = vadd.f32 %v25, %v54
  %56 = vdwg.mxu0
  %v57 = vmul.f32 %v52, 0.17677669
  %v58 = vmul.f32 %v55, 0.17677669
  %59 = vst.msk [vmem:[%s3] sm:$0xff] %vm27, %v57
  %60 = vst.msk [vmem:[%s3 + $0x8] sm:$0xff] %vm27, %v58
  %63 = vrot.lane.b32.xlu0 %v52, 96
  %v64 = vpop.permute.xlu0 %63
  %65 = vrot.lane.b32.xlu0 %v55, 96
  %v66 = vpop.permute.xlu0 %65
  %69 = vst.msk [vmem:[%s4] sm:$0xff] %vm27, %v64
  %70 = vst.msk [vmem:[%s4 + $0x8] sm:$0xff] %vm27, %v66
  %71 = vrot.lane.b32.xlu0 %v52, 64
  %v72 = vpop.permute.xlu0 %71
  %73 = vrot.lane.b32.xlu0 %v55, 64
  %v74 = vpop.permute.xlu0 %73
  %77 = vst.msk [vmem:[%s5] sm:$0xff] %vm27, %v72
  %78 = vst.msk [vmem:[%s5 + $0x8] sm:$0xff] %vm27, %v74
  // Predicated region
  $region14: #{self_attention.2} parent=0 // pred_check
    _
  $region15: #{self_attention.2} parent=0 // pred_check_branch
    %80 = sbr.rel (0) target = $region17
  $region16: #{self_attention.2} parent=0 // pred_region
    _
  $region17: #{self_attention.2} parent=0 // pred_fallthru
    _
  // Predicated region
  $region18: #{self_attention.2} parent=0 // pred_check
    _
  $region19: #{self_attention.2} parent=0 // pred_check_branch
    %82 = sbr.rel (0) target = $region21
  $region20: #{self_attention.2} parent=0 // pred_region
    _
  $region21: #{self_attention.2} parent=0 // pred_fallthru
    _
  // Predicated region
  $region22: #{self_attention.2} parent=0 // pred_check
    _
  $region23: #{self_attention.2} parent=0 // pred_check_branch
    %84 = sbr.rel (0) target = $region25
  $region24: #{self_attention.2} parent=0 // pred_region
    _
  $region25: #{self_attention.2} parent=0 // pred_fallthru
    _
  // Predicated region
  $region26: #{self_attention.2} parent=0 // pred_check
    _
  $region27: #{self_attention.2} parent=0 // pred_check_branch
    %86 = sbr.rel (0) target = $region29
  $region28: #{self_attention.2} parent=0 // pred_region
    _
  $region29: #{self_attention.2} parent=0 // pred_fallthru
    _
  // Predicated region
  $region30: #{self_attention.2} parent=0 // pred_check
    _
  $region31: #{self_attention.2} parent=0 // pred_check_branch
    %88 = sbr.rel (0) target = $region33
  $region32: #{self_attention.2} parent=0 // pred_region
    _
  $region33: #{self_attention.2} parent=0 // pred_fallthru
    _
  // Predicated region
  $region34: #{self_attention.2} parent=0 // pred_check
    _
  $region35: #{self_attention.2} parent=0 // pred_check_branch
    %90 = sbr.rel (0) target = $region37
  $region36: #{self_attention.2} parent=0 // pred_region
    _
  $region37: #{self_attention.2} parent=0 // pred_fallthru
    _

// kernel: self_attention.3
$region0: #{self_attention.3}
  #allocation0 [shape = 'u32[]', space=smem, size = 0x4, offset = 0x4, fixed_abs, tag = 'smem constant byte address 0x4 - core index']
  #allocation1 [shape = 'u32[72,128]{1,0:T(1,128)}', space=vmem, size = 0x9000, scoped, tag = 'internal scratch']
  #allocation2 [shape = 'f32[8,1]{1,0:T(8,128)}', space=vmem, size = 0x1000, scoped, tag = 'scratch operand']
  #allocation3 [shape = 'f32[8,1]{1,0:T(8,128)}', space=vmem, size = 0x1000, scoped, tag = 'scratch operand']
  #allocation4 [shape = 'f32[8,32]{1,0:T(8,128)}', space=vmem, size = 0x1000, scoped, tag = 'scratch operand']
  %s0 = inlined_call_operand.vmem [shape: f32[2,8,32], index: 0, kind: input, shape index: {}]
  %s1 = inlined_call_operand.vmem [shape: f32[2,8,32], index: 1, kind: input, shape index: {}]
  %s2 = inlined_call_operand.vmem [shape: f32[2,8,32], index: 2, kind: input, shape index: {}]
  %s3 = inlined_call_operand.hbm [shape: f32[2,8,32], index: 3, kind: output, shape index: {}]
  %s4 = sld [smem:[#allocation0]]
  $region53: #{self_attention.3} parent=0
    _
  %s6 = ssub.s32 1, %s4
  %s7 = scalar_select 0, %s6, %s4
  $region1: #{self_attention.3} parent=0
    #allocation5 [shape = 'u8[8192]{0}', space=vmem, size = 0x2000, scoped, tag = 'output window, operand 0']
    #allocation6 [shape = 's32[2]{0}', space=sflag, size = 0x8, scoped, tag = 'scoped memory for self_attention.3']
    %8 = vsyncpa [#allocation6], 0
    %s9 = scalar_lea.sflag [#allocation6], 1
    %10 = vsyncpa %s9, 0
    loop: start=0, step=1, limit=4
    $region2: #{self_attention.3} parent=1 // loop_pre_header
      _
    $region3: #{self_attention.3} parent=1 // loop_header
      %s12 = sphi 0, %s16
      %p13 = scmp.ge.s32.totalorder %s12, 4
      %s19 = sphi 0, %s38
      %s20 = sphi 0, %s34
      %s21 = sphi 0, %s30
      %s22 = sphi 0, %s19
      %s23 = sphi 0, %s20
      %s24 = sphi 0, %s21
      %s25 = sphi 0, %s22
      %s26 = sphi 0, %s23
      %s27 = sphi 0, %s24
      %s43 = sphi 0, %s45
      %s46 = sphi 0, %s43
      %s47 = sphi 0, %s46
      %s63 = sphi 0, %s47
      %s71 = sphi 0, %s73
      %s74 = sphi 0, %s71
      %s75 = sphi 0, %s74
      %s91 = sphi 0, %s75
      %s99 = sphi 0, %s101
      %s102 = sphi 0, %s99
      %s103 = sphi 0, %s102
      %s119 = sphi 0, %s103
      %s127 = sphi 0, %s129
      %s130 = sphi 0, %s127
      %s131 = sphi 0, %s130
      %s147 = sphi 0, %s131
    $region4: #{self_attention.3} parent=1 // loop_header_branch
      %15 = sbr.rel (%p13) target = $region8
    $region5: #{self_attention.3} parent=1 // loop_body
      %s17 = ssub.s32 %s12, 1
      %s18 = ssub.s32 %s12, 2
      %s28 = sadd.s32 1, %s21
      %p29 = scmp.ge.s32.totalorder %s28, 1
      %s30 = scalar_select %p29, 0, %s28
      %s31 = sadd.s32 1, %s20
      %s32 = scalar_select %p29, %s31, %s20
      %p33 = scmp.ge.s32.totalorder %s32, 1
      %s34 = scalar_select %p33, 0, %s32
      %s35 = sadd.s32 1, %s19
      %s36 = scalar_select %p33, %s35, %s19
      %p37 = scmp.ge.s32.totalorder %s36, 2
      %s38 = scalar_select %p37, 0, %s36
      %s39 = ssub.s32 %s19, %s38
      %s40 = ssub.s32 %s20, %s34
      %s41 = sor.u32 %s39, %s40
      %p42 = scmp.eq.s32.totalorder %s41, 0
      %s44 = sadd.s32 %s43, 1
      %s45 = scalar_select %p42, %s43, %s44
      %p48 = pneg %p42
      %p49 = scmp.eq.s32.totalorder %s12, 1
      %p50 = por %p48, %p49
      %p51 = scmp.ne.s32.totalorder %s43, %s46
      %p52 = scmp.eq.s32.totalorder %s12, 0
      %p53 = por %p51, %p52
      %p54 = scmp.ne.s32.totalorder %s43, %s46
      %p55 = scmp.eq.s32.totalorder %s17, 1
      %p56 = por %p54, %p55
      %p57 = scmp.ne.s32.totalorder %s46, %s47
      %p58 = scmp.eq.s32.totalorder %s17, 0
      %p59 = por %p57, %p58
      %p60 = scmp.ne.s32.totalorder %s46, %s47
      %p61 = scmp.eq.s32.totalorder %s18, 1
      %p62 = por %p60, %p61
      %p64 = scmp.ne.s32.totalorder %s47, %s63
      %p65 = scmp.eq.s32.totalorder %s18, 0
      %p66 = por %p64, %p65
      %s67 = ssub.s32 %s19, %s38
      %s68 = ssub.s32 %s21, %s30
      %s69 = sor.u32 %s67, %s68
      %p70 = scmp.eq.s32.totalorder %s69, 0
      %s72 = sadd.s32 %s71, 1
      %s73 = scalar_select %p70, %s71, %s72
      %p76 = pneg %p70
      %p77 = scmp.eq.s32.totalorder %s12, 1
      %p78 = por %p76, %p77
      %p79 = scmp.ne.s32.totalorder %s71, %s74
      %p80 = scmp.eq.s32.totalorder %s12, 0
      %p81 = por %p79, %p80
      %p82 = scmp.ne.s32.totalorder %s71, %s74
      %p83 = scmp.eq.s32.totalorder %s17, 1
      %p84 = por %p82, %p83
      %p85 = scmp.ne.s32.totalorder %s74, %s75
      %p86 = scmp.eq.s32.totalorder %s17, 0
      %p87 = por %p85, %p86
      %p88 = scmp.ne.s32.totalorder %s74, %s75
      %p89 = scmp.eq.s32.totalorder %s18, 1
      %p90 = por %p88, %p89
      %p92 = scmp.ne.s32.totalorder %s75, %s91
      %p93 = scmp.eq.s32.totalorder %s18, 0
      %p94 = por %p92, %p93
      %s95 = ssub.s32 %s19, %s38
      %s96 = ssub.s32 %s21, %s30
      %s97 = sor.u32 %s95, %s96
      %p98 = scmp.eq.s32.totalorder %s97, 0
      %s100 = sadd.s32 %s99, 1
      %s101 = scalar_select %p98, %s99, %s100
      %p104 = pneg %p98
      %p105 = scmp.eq.s32.totalorder %s12, 1
      %p106 = por %p104, %p105
      %p107 = scmp.ne.s32.totalorder %s99, %s102
      %p108 = scmp.eq.s32.totalorder %s12, 0
      %p109 = por %p107, %p108
      %p110 = scmp.ne.s32.totalorder %s99, %s102
      %p111 = scmp.eq.s32.totalorder %s17, 1
      %p112 = por %p110, %p111
      %p113 = scmp.ne.s32.totalorder %s102, %s103
      %p114 = scmp.eq.s32.totalorder %s17, 0
      %p115 = por %p113, %p114
      %p116 = scmp.ne.s32.totalorder %s102, %s103
      %p117 = scmp.eq.s32.totalorder %s18, 1
      %p118 = por %p116, %p117
      %p120 = scmp.ne.s32.totalorder %s103, %s119
      %p121 = scmp.eq.s32.totalorder %s18, 0
      %p122 = por %p120, %p121
      %s123 = ssub.s32 %s19, %s38
      %s124 = ssub.s32 %s20, %s34
      %s125 = sor.u32 %s123, %s124
      %p126 = scmp.eq.s32.totalorder %s125, 0
      %s128 = sadd.s32 %s127, 1
      %s129 = scalar_select %p126, %s127, %s128
      %p132 = pneg %p126
      %p133 = scmp.eq.s32.totalorder %s12, 1
      %p134 = por %p132, %p133
      %p135 = scmp.ne.s32.totalorder %s127, %s130
      %p136 = scmp.eq.s32.totalorder %s12, 0
      %p137 = por %p135, %p136
      %p138 = scmp.ne.s32.totalorder %s127, %s130
      %p139 = scmp.eq.s32.totalorder %s17, 1
      %p140 = por %p138, %p139
      %p141 = scmp.ne.s32.totalorder %s130, %s131
      %p142 = scmp.eq.s32.totalorder %s17, 0
      %p143 = por %p141, %p142
      %p144 = scmp.ne.s32.totalorder %s130, %s131
      %p145 = scmp.eq.s32.totalorder %s18, 1
      %p146 = por %p144, %p145
      %p148 = scmp.ne.s32.totalorder %s131, %s147
      %p149 = scmp.eq.s32.totalorder %s18, 0
      %p150 = por %p148, %p149
      %p151 = scmp.le.s32.totalorder 1, %s12
      %p152 = scmp.lt.s32.totalorder %s12, 3
      %p153 = pnand %p151, %p152
      %p154 = pneg %p153
      // Predicated region
      $region9: #{self_attention.3} parent=5 // pred_check
        _
      $region10: #{self_attention.3} parent=5 // pred_check_branch
        %156 = sbr.rel (%p153) target = $region12
      $region11: #{self_attention.3} parent=5 // pred_region
        %s157 = ssub.s32 %s12, 1
      $region12: #{self_attention.3} parent=5 // pred_fallthru
        _
      %p158 = scmp.lt.s32.totalorder %s12, 2
      // Predicated region
      $region13: #{self_attention.3} parent=5 // pred_check
        %p159 = pneg %p158
      $region14: #{self_attention.3} parent=5 // pred_check_branch
        %161 = sbr.rel (%p159) target = $region16
      $region15: #{self_attention.3} parent=5 // pred_region
        // Predicated region
        $region17: #{self_attention.3} parent=15 // pred_check
          %p162 = pneg %p53
        $region18: #{self_attention.3} parent=15 // pred_check_branch
          %164 = sbr.rel (%p162) target = $region20
        $region19: #{self_attention.3} parent=15 // pred_region
          %p165 = scmp.lt.s32.totalorder %s19, 1
          %s166 = scalar_select %p165, %s19, 1
          %p167 = scmp.lt.s32.totalorder %s20, 0
          %s168 = scalar_select %p167, %s20, 0
          %s169 = sadd.s32 %s168, %s166
          %s170 = smul.addr %s169, 8
          %s171 = scalar_lea.vmem %s0, %s170
        $region20: #{self_attention.3} parent=15 // pred_fallthru
          _
        // Predicated region
        $region21: #{self_attention.3} parent=15 // pred_check
          %p172 = pneg %p81
        $region22: #{self_attention.3} parent=15 // pred_check_branch
          %174 = sbr.rel (%p172) target = $region24
        $region23: #{self_attention.3} parent=15 // pred_region
          %p175 = scmp.lt.s32.totalorder %s19, 1
          %s176 = scalar_select %p175, %s19, 1
          %p177 = scmp.lt.s32.totalorder %s21, 0
          %s178 = scalar_select %p177, %s21, 0
          %s179 = sadd.s32 %s178, %s176
          %s180 = smul.addr %s179, 8
          %s181 = scalar_lea.vmem %s1, %s180
        $region24: #{self_attention.3} parent=15 // pred_fallthru
          _
        // Predicated region
        $region25: #{self_attention.3} parent=15 // pred_check
          %p182 = pneg %p109
        $region26: #{self_attention.3} parent=15 // pred_check_branch
          %184 = sbr.rel (%p182) target = $region28
        $region27: #{self_attention.3} parent=15 // pred_region
          %p185 = scmp.lt.s32.totalorder %s19, 1
          %s186 = scalar_select %p185, %s19, 1
          %p187 = scmp.lt.s32.totalorder %s21, 0
          %s188 = scalar_select %p187, %s21, 0
          %s189 = sadd.s32 %s188, %s186
          %s190 = smul.addr %s189, 8
          %s191 = scalar_lea.vmem %s2, %s190
        $region28: #{self_attention.3} parent=15 // pred_fallthru
          _
      $region16: #{self_attention.3} parent=5 // pred_fallthru
        _
      %p192 = scmp.le.s32.totalorder 1, %s12
      %p193 = scmp.lt.s32.totalorder %s12, 3
      %p194 = pnand %p192, %p193
      %p195 = pneg %p194
      // Predicated region
      $region29: #{self_attention.3} parent=5 // pred_check
        _
      $region30: #{self_attention.3} parent=5 // pred_check_branch
        %197 = sbr.rel (%p194) target = $region32
      $region31: #{self_attention.3} parent=5 // pred_region
        %s198 = ssub.s32 %s12, 1
        %p199 = scmp.lt.s32.totalorder %s22, 1
        %s200 = scalar_select %p199, %s22, 1
        %p201 = scmp.lt.s32.totalorder %s23, 0
        %s202 = scalar_select %p201, %s23, 0
        %s203 = sadd.s32 %s202, %s200
        %s204 = smul.addr %s203, 8
        %s205 = scalar_lea.vmem %s0, %s204
        %p206 = pneg %p59
        %p207 = pneg %p56
        %p208 = scmp.lt.s32.totalorder %s22, 1
        %s209 = scalar_select %p208, %s22, 1
        %p210 = scmp.lt.s32.totalorder %s24, 0
        %s211 = scalar_select %p210, %s24, 0
        %s212 = sadd.s32 %s211, %s209
        %s213 = smul.addr %s212, 8
        %s214 = scalar_lea.vmem %s1, %s213
        %p215 = pneg %p87
        %p216 = pneg %p84
        %p217 = scmp.lt.s32.totalorder %s22, 1
        %s218 = scalar_select %p217, %s22, 1
        %p219 = scmp.lt.s32.totalorder %s24, 0
        %s220 = scalar_select %p219, %s24, 0
        %s221 = sadd.s32 %s220, %s218
        %s222 = smul.addr %s221, 8
        %s223 = scalar_lea.vmem %s2, %s222
        %p224 = pneg %p115
        %p225 = pneg %p112
        %p226 = pneg %p143
        %p227 = pneg %p140
        %s228 = sand.u32 %s130, 1
        %s229 = scalar_lea.sflag [#allocation6], %s228
        %s230 = sand.u32 %s130, 1
        %s231 = smul.addr %s230, 8
        %s232 = scalar_lea.vmem [#allocation5], %s231
        %p233 = scmp.lt.s32.totalorder %s22, 1
        %s234 = scalar_select %p233, %s22, 1
        %p235 = scmp.lt.s32.totalorder %s23, 0
        %s236 = scalar_select %p235, %s23, 0
        %s237 = sadd.s32 %s236, %s234
        %s238 = smul.addr %s237, 8
        %s239 = scalar_lea.vmem %s0, %s238
        %p240 = scmp.lt.s32.totalorder %s22, 1
        %s241 = scalar_select %p240, %s22, 1
        %p242 = scmp.lt.s32.totalorder %s24, 0
        %s243 = scalar_select %p242, %s24, 0
        %s244 = sadd.s32 %s243, %s241
        %s245 = smul.addr %s244, 8
        %s246 = scalar_lea.vmem %s1, %s245
        %p247 = scmp.lt.s32.totalorder %s22, 1
        %s248 = scalar_select %p247, %s22, 1
        %p249 = scmp.lt.s32.totalorder %s24, 0
        %s250 = scalar_select %p249, %s24, 0
        %s251 = sadd.s32 %s250, %s248
        %s252 = smul.addr %s251, 8
        %s253 = scalar_lea.vmem %s2, %s252
        %p254 = scmp.eq.s32.totalorder %s24, 0
        // Predicated region
        $region33: #{self_attention.3} parent=31 // pred_check
          %p255 = pneg %p254
        $region34: #{self_attention.3} parent=31 // pred_check_branch
          %257 = sbr.rel (%p255) target = $region36
        $region35: #{self_attention.3} parent=31 // pred_region
          %vm258 = vcmask 7168
          %259 = vst.msk [vmem:[#allocation2] sm:$0xff] %vm258, -inf
          %260 = vst.msk [vmem:[#allocation3] sm:$0xff] %vm258, 0.0
          %vm261 = vcmask 261120
          %262 = vst.msk [vmem:[#allocation4] sm:$0xff] %vm261, 0.0
        $region36: #{self_attention.3} parent=31 // pred_fallthru
          _
        %v263 = vld [vmem:[%s239] sm:$0xff]
        %v264 = vld [vmem:[%s246] sm:$0xff]
        %vm265 = vcmask 261120
        %v267 = vsel %vm265, %v263, 0
        %v270 = vsel %vm265, %v264, 0
        %272 = vmatpush.xpose.msra.mxu0 0.0
        %273 = vmatpush.xpose.msra.mxu0 0.0
        %274 = vmatpush.xpose.msra.mxu0 0.0
        %275 = vmatpush.xpose.msra.mxu0 0.0
        %276 = vmatpush.xpose.msra.mxu0 0.0
        %277 = vmatpush.xpose.msra.mxu0 0.0
        %278 = vmatpush.xpose.msra.mxu0 0.0
        %279 = vmatpush.xpose.msra.mxu0 0.0
        %280 = vmatpush.xpose.msra.mxu0 0.0
        %281 = vmatpush.xpose.msra.mxu0 0.0
        %282 = vmatpush.xpose.msra.mxu0 0.0
        %283 = vmatpush.xpose.msra.mxu0 0.0
        %284 = vmatpush.xpose.msra.mxu0 0.0
        %285 = vmatpush.xpose.msra.mxu0 0.0
        %286 = vmatpush.xpose.msra.mxu0 0.0
        %287 = vmatpush.xpose.msra.mxu0 %v270
        %288 = vmatmul.f32.gmra.mxu0 %v267
        %v289 = vpop.f32.mrf.mxu0
        %v290 = vadd.f32 0.0, %v289
        %291 = vdwg.mxu0
        %v292 = vld [vmem:[#allocation2] sm:$0xff]
        %vm293 = vcmask 64512
        %v294 = vsel %vm293, %v290, -inf
        %295 = vmax.xlane.f32.xlu0 %v294
        %v296 = vpop.xlane.xlu0 %295
        %v297 = vmax.f32 %v292, %v296
        %v298 = vsub.f32 %v292, %v297
        %v299 = vmul.f32 %v298, 1.442695
        %v300 = vpow.pop %v299
        %302 = vset.pattern.permute.xlu0 0
        %303 = vperm.xlu0 %302, %v297
        %v304 = vpop.permute.xlu0 %303
        %v306 = vsub.f32 %v290, %v304
        %v307 = vmul.f32 %v306, 1.442695
        %v308 = vpow.pop %v307
        %v309 = vld [vmem:[#allocation3] sm:$0xff]
        %v310 = vmul.f32 %v300, %v309
        %v311 = vsel %vm293, %v308, 0.0
        %312 = vadd.xlane.f32.xlu0 %v311
        %v313 = vpop.xlane.xlu0 %312
        %v314 = vadd.f32 %v310, %v313
        %vm315 = vcmask 7168
        %316 = vst.msk [vmem:[#allocation3] sm:$0xff] %vm315, %v314
        %v317 = vld [vmem:[#allocation4] sm:$0xff]
        %319 = vset.pattern.permute.xlu0 0
        %320 = vperm.xlu0 %319, %v300
        %v321 = vpop.permute.xlu0 %320
        %v323 = vmul.f32 %v321, %v317
        %v324 = vld [vmem:[%s253] sm:$0xff]
        %v326 = vsel %vm293, %v308, 0
        %328 = vmatpush.msra.mxu0 0.0
        %329 = vmatpush.msra.mxu0 0.0
        %330 = vmatpush.msra.mxu0 0.0
        %331 = vmatpush.msra.mxu0 0.0
        %332 = vmatpush.msra.mxu0 0.0
        %333 = vmatpush.msra.mxu0 0.0
        %334 = vmatpush.msra.mxu0 0.0
        %335 = vmatpush.msra.mxu0 0.0
        %336 = vmatpush.msra.mxu0 0.0
        %337 = vmatpush.msra.mxu0 0.0
        %338 = vmatpush.msra.mxu0 0.0
        %339 = vmatpush.msra.mxu0 0.0
        %340 = vmatpush.msra.mxu0 0.0
        %341 = vmatpush.msra.mxu0 0.0
        %342 = vmatpush.msra.mxu0 0.0
        %343 = vmatpush.msra.mxu0 %v324
        %344 = vmatmul.f32.gmra.mxu0 %v326
        %v345 = vpop.f32.mrf.mxu0
        %v346 = vadd.f32 0.0, %v345
        %347 = vdwg.mxu0
        %v348 = vadd.f32 %v323, %v346
        %349 = vst.msk [vmem:[#allocation4] sm:$0xff] %vm265, %v348
        %350 = vst.msk [vmem:[#allocation2] sm:$0xff] %vm315, %v297
        // Predicated region
        $region37: #{self_attention.3} parent=31 // pred_check
          %p351 = pneg %p254
        $region38: #{self_attention.3} parent=31 // pred_check_branch
          %353 = sbr.rel (%p351) target = $region40
        $region39: #{self_attention.3} parent=31 // pred_region
          %v354 = vld [vmem:[#allocation3] sm:$0xff]
          %v355 = vrcp.pop %v354
          %v356 = vld [vmem:[#allocation4] sm:$0xff]
          %358 = vset.pattern.permute.xlu0 0
          %359 = vperm.xlu0 %358, %v355
          %v360 = vpop.permute.xlu0 %359
          %v362 = vmul.f32 %v356, %v360
          %363 = vst.msk [vmem:[%s232] sm:$0xff] %vm265, %v362
        $region40: #{self_attention.3} parent=31 // pred_fallthru
          _
        %s364 = sand.u32 %s130, 1
        %s365 = scalar_lea.sflag [#allocation6], %s364
        %s366 = sand.u32 %s130, 1
        %s367 = smul.addr %s366, 8
        %s368 = scalar_lea.vmem [#allocation5], %s367
        // Predicated region
        $region41: #{self_attention.3} parent=31 // pred_check
          %p369 = pneg %p140
        $region42: #{self_attention.3} parent=31 // pred_check_branch
          %371 = sbr.rel (%p369) target = $region44
        $region43: #{self_attention.3} parent=31 // pred_region
          %373 = vsyncadd %s365, 0
          %s374 = sadd.s32 %s23, %s22
          %s375 = smul.addr %s374, 8
          %s376 = scalar_lea.hbm %s3, %s375
          %s378 = sshll.u32 %s368, 4
          %s379 = int_to_ptr.vmem [resolvable:$true] %s378
          %s380 = sshll.u32 %s376, 4
          %s381 = int_to_ptr.hbm [resolvable:$true] %s380
          %383 = dma.vmem_to_hbm [thread:$0]  %s379, 128, %s381, %s365
        $region44: #{self_attention.3} parent=31 // pred_fallthru
          _
      $region32: #{self_attention.3} parent=5 // pred_fallthru
        _
      %p384 = scmp.le.s32.totalorder 2, %s12
      // Predicated region
      $region45: #{self_attention.3} parent=5 // pred_check
        %p385 = pneg %p384
      $region46: #{self_attention.3} parent=5 // pred_check_branch
        %387 = sbr.rel (%p385) target = $region48
      $region47: #{self_attention.3} parent=5 // pred_region
        %s388 = ssub.s32 %s12, 2
        // Predicated region
        $region49: #{self_attention.3} parent=47 // pred_check
          %p389 = pneg %p146
        $region50: #{self_attention.3} parent=47 // pred_check_branch
          %391 = sbr.rel (%p389) target = $region52
        $region51: #{self_attention.3} parent=47 // pred_region
          %s392 = sand.u32 %s131, 1
          %s393 = scalar_lea.sflag [#allocation6], %s392
          %s394 = sand.u32 %s131, 1
          %s395 = smul.addr %s394, 8
          %s396 = scalar_lea.vmem [#allocation5], %s395
          %398 = dma.done %s393, 128
        $region52: #{self_attention.3} parent=47 // pred_fallthru
          _
      $region48: #{self_attention.3} parent=5 // pred_fallthru
        _
    $region6: #{self_attention.3} parent=1 // loop_footer
      %s16 = sadd.s32 1, %s12
    $region7: #{self_attention.3} parent=1 // loop_footer_branch
      %11 = sbr.rel target = $region3
    $region8: #{self_attention.3} parent=1 // loop_exit
      _
    %399 = vsyncpa [#allocation6], 1
    %s400 = scalar_lea.sflag [#allocation6], 1
    %401 = vsyncpa %s400, 1

</llo_original>
